<compile_context>
chip_gen: v7x
topology: tpu7x:2x2x1
jax: 0.10.0
libtpu: 0.0.40
codegen_flags: <defaults>
</compile_context>

<pallas_src>
import functools

import jax
import jax.numpy as jnp
from jax.experimental import pallas as pl
from jax.experimental.pallas import tpu as pltpu


# ---------------------------------------------------------------------------
# Pallas kernel: fused center-of-mass + MSE-to-center loss
# ---------------------------------------------------------------------------
def _centralized_loss_kernel(k_ref, out_ref, *, k_size, center):
    k = k_ref[...].astype(jnp.float32)                       # (K, K)

    # Row / column marginals (tiny axis reductions; no full-matrix temporaries).
    row_sums = jnp.sum(k, axis=1, keepdims=True)              # (K, 1)
    col_sums = jnp.sum(k, axis=0, keepdims=True)              # (1, K)

    # Index weights generated directly in the reduced-vector shapes
    # (TPU needs >= 2-D iota).
    idx_r = jax.lax.broadcasted_iota(jnp.int32, (k_size, 1), 0).astype(jnp.float32)
    idx_c = jax.lax.broadcasted_iota(jnp.int32, (1, k_size), 1).astype(jnp.float32)

    total = jnp.sum(row_sums)                                  # sum(kernel)
    s_r = jnp.sum(row_sums * idx_r)                            # sum_i rowsum[i] * i
    s_c = jnp.sum(col_sums * idx_c)                            # sum_j colsum[j] * j

    # Single reciprocal of the shared denominator, reused for both coordinates.
    # (All-zero kernels give inf/nan here, matching the PyTorch reference.)
    inv_total = 1.0 / total
    d_r = s_r * inv_total - center
    d_c = s_c * inv_total - center

    # MSE over the two coordinates (target is the same scalar `center`);
    # scalar store through SMEM.
    out_ref[0, 0] = 0.5 * (d_r * d_r + d_c * d_c)


def centralized_loss(kernel, scale_factor=0.5):
    """kernel: (k_size, k_size) array -> scalar f32 loss (CentralizedLoss.forward)."""
    k_size = kernel.shape[0]
    assert kernel.shape == (k_size, k_size), kernel.shape
    center = float(k_size // 2 + 0.5 * (int(1.0 / scale_factor) - k_size % 2))

    body = functools.partial(_centralized_loss_kernel, k_size=k_size, center=center)

    out = pl.pallas_call(
        body,
        out_shape=jax.ShapeDtypeStruct((1, 1), jnp.float32),
        # No grid: single invocation, full array resident in VMEM.
        in_specs=[pl.BlockSpec(memory_space=pltpu.MemorySpace.VMEM)],
        # Scalar result goes out through SMEM (sst + tiny DMA).
        out_specs=pl.BlockSpec(memory_space=pltpu.MemorySpace.SMEM),
    )(kernel)
    return out[0, 0]


# ---------------------------------------------------------------------------
# Pure-JAX reference (mirrors the PyTorch forward) for a correctness check
# ---------------------------------------------------------------------------
def centralized_loss_ref(kernel, scale_factor=0.5):
    k_size = kernel.shape[0]
    center = k_size // 2 + 0.5 * (int(1.0 / scale_factor) - k_size % 2)
    idx = jnp.arange(k_size, dtype=jnp.float32)
    kf = kernel.astype(jnp.float32)
    r_sum = jnp.sum(kf, axis=1)
    c_sum = jnp.sum(kf, axis=0)
    total = jnp.sum(kf)
    com = jnp.stack([jnp.dot(r_sum, idx) / total, jnp.dot(c_sum, idx) / total])
    return jnp.mean((com - center) ** 2)


if __name__ == "__main__":
    key = jax.random.PRNGKey(0)
    k_size = 16
    kern = jax.random.uniform(key, (k_size, k_size), dtype=jnp.float32)

    loss = centralized_loss(kern, scale_factor=0.5)
    loss = jax.block_until_ready(loss)

    ref = centralized_loss_ref(kern, scale_factor=0.5)
    assert loss.shape == () and bool(jnp.isfinite(loss)), loss
    assert bool(jnp.allclose(loss, ref, rtol=1e-5, atol=1e-6)), (loss, ref)
    print("KERNEL_OK")
</pallas_src>

<mosaic_0001>
module attributes {stable_mosaic.version = 11 : i64} {
  func.func @_centralized_loss_kernel(%arg0: memref<16x16xf32, #tpu.memory_space<vmem>>, %arg1: memref<1x1xf32, #tpu.memory_space<smem>>) attributes {dimension_semantics = [], scalar_prefetch = 0 : i64, scratch_operands = 0 : i64, tpu.core_type = #tpu.core_type<tc>} {
    %c0 = arith.constant 0 : index
    %c0_0 = arith.constant 0 : index
    %0 = vector.load %arg0[%c0, %c0_0] : memref<16x16xf32, #tpu.memory_space<vmem>>, vector<16x16xf32>
    %cst = arith.constant dense<0.000000e+00> : vector<16xf32>
    %1 = vector.multi_reduction <add>, %0, %cst [1] : vector<16x16xf32> to vector<16xf32>
    %2 = vector.shape_cast %1 : vector<16xf32> to vector<16x1xf32>
    %cst_1 = arith.constant dense<0.000000e+00> : vector<16xf32>
    %3 = vector.multi_reduction <add>, %0, %cst_1 [0] : vector<16x16xf32> to vector<16xf32>
    %4 = vector.shape_cast %3 : vector<16xf32> to vector<1x16xf32>
    %5 = tpu.iota {dimensions = array<i32: 0>} : vector<16x1xi32>
    %6 = arith.sitofp %5 : vector<16x1xi32> to vector<16x1xf32>
    %7 = tpu.iota {dimensions = array<i32: 1>} : vector<1x16xi32>
    %8 = arith.sitofp %7 : vector<1x16xi32> to vector<1x16xf32>
    %9 = vector.shape_cast %2 : vector<16x1xf32> to vector<1x16x1xf32>
    %cst_2 = arith.constant dense<0.000000e+00> : vector<1xf32>
    %10 = vector.multi_reduction <add>, %9, %cst_2 [1, 2] : vector<1x16x1xf32> to vector<1xf32>
    %11 = vector.shape_cast %10 : vector<1xf32> to vector<1x1x1xf32>
    %12 = vector.extract %11[0, 0, 0] : f32 from vector<1x1x1xf32>
    %13 = arith.mulf %2, %6 : vector<16x1xf32>
    %14 = vector.shape_cast %13 : vector<16x1xf32> to vector<1x16x1xf32>
    %cst_3 = arith.constant dense<0.000000e+00> : vector<1xf32>
    %15 = vector.multi_reduction <add>, %14, %cst_3 [1, 2] : vector<1x16x1xf32> to vector<1xf32>
    %16 = vector.shape_cast %15 : vector<1xf32> to vector<1x1x1xf32>
    %17 = vector.extract %16[0, 0, 0] : f32 from vector<1x1x1xf32>
    %18 = arith.mulf %4, %8 : vector<1x16xf32>
    %19 = vector.shape_cast %18 : vector<1x16xf32> to vector<1x1x16xf32>
    %cst_4 = arith.constant dense<0.000000e+00> : vector<1xf32>
    %20 = vector.multi_reduction <add>, %19, %cst_4 [1, 2] : vector<1x1x16xf32> to vector<1xf32>
    %21 = vector.shape_cast %20 : vector<1xf32> to vector<1x1x1xf32>
    %22 = vector.extract %21[0, 0, 0] : f32 from vector<1x1x1xf32>
    %cst_5 = arith.constant 1.000000e+00 : f32
    %23 = arith.divf %cst_5, %12 : f32
    %24 = arith.mulf %17, %23 : f32
    %cst_6 = arith.constant 9.000000e+00 : f32
    %25 = arith.subf %24, %cst_6 : f32
    %26 = arith.mulf %22, %23 : f32
    %cst_7 = arith.constant 9.000000e+00 : f32
    %27 = arith.subf %26, %cst_7 : f32
    %28 = arith.mulf %25, %25 : f32
    %29 = arith.mulf %27, %27 : f32
    %30 = arith.addf %28, %29 : f32
    %cst_8 = arith.constant 5.000000e-01 : f32
    %31 = arith.mulf %cst_8, %30 : f32
    %c0_9 = arith.constant 0 : index
    %c0_10 = arith.constant 0 : index
    %32 = memref.load %arg1[%c0_9, %c0_10] : memref<1x1xf32, #tpu.memory_space<smem>>
    memref.store %31, %arg1[%c0_9, %c0_10] : memref<1x1xf32, #tpu.memory_space<smem>>
    return
  }
}

</mosaic_0001>

<llo_original>
// kernel: tpu_custom_call.1
$region0: #{tpu_custom_call.1}
  #allocation0 [shape = 'u32[]', space=smem, size = 0x4, offset = 0x4, fixed_abs, tag = 'smem constant byte address 0x4 - core index']
  #allocation1 [shape = 'u32[144,128]{1,0:T(1,128)}', space=vmem, size = 0x12000, scoped, tag = 'internal scratch']
  %s0 = inlined_call_operand.hbm [shape: f32[16,16], index: 0, kind: input, shape index: {}]
  %s1 = inlined_call_operand.hbm [shape: f32[1,1], index: 1, kind: output, shape index: {}]
  %s2 = sld [smem:[#allocation0]]
  $region18: #{tpu_custom_call.1} parent=0
    _
  %s4 = ssub.s32 1, %s2
  %s5 = scalar_select 0, %s4, %s2
  $region1: #{tpu_custom_call.1} parent=0
    #allocation2 [shape = 'u8[8192]{0}', space=vmem, size = 0x2000, scoped, tag = 'input window, operand 0, single buffered']
    #allocation3 [shape = 's32[1]{0}', space=sflag, size = 0x4, scoped, tag = 'scoped memory for tpu_custom_call.1']
    #allocation4 [shape = 's32[1]{0}', space=sflag, size = 0x4, scoped, tag = 'scoped memory for tpu_custom_call.1']
    #allocation5 [shape = 'u8[512]{0}', space=smem, size = 0x200, scoped, tag = 'output window, operand 0, single buffered']
    %6 = vsyncpa [#allocation3], 0
    %7 = vsyncpa [#allocation4], 0
    // Predicated region
    $region2: #{tpu_custom_call.1} parent=1 // pred_check
      _
    $region3: #{tpu_custom_call.1} parent=1 // pred_check_branch
      %9 = sbr.rel (0) target = $region5
    $region4: #{tpu_custom_call.1} parent=1 // pred_region
      %s11 = ssub.s32 256, 256
      %12 = vsyncadd [#allocation3], %s11
      %s13 = sshll.u32 [#allocation2], 4
      %s14 = int_to_ptr.vmem [resolvable:$true] %s13
      %19 = dma.hbm_to_vmem [thread:$0]  %s0, 256, %s14, [#allocation3], 128, 128, 8
    $region5: #{tpu_custom_call.1} parent=1 // pred_fallthru
      _
    // Predicated region
    $region6: #{tpu_custom_call.1} parent=1 // pred_check
      _
    $region7: #{tpu_custom_call.1} parent=1 // pred_check_branch
      %21 = sbr.rel (0) target = $region9
    $region8: #{tpu_custom_call.1} parent=1 // pred_region
      %22 = dma.done [#allocation3], 256
    $region9: #{tpu_custom_call.1} parent=1 // pred_fallthru
      _
    %v23 = vld [vmem:[#allocation2] sm:$0xff]
    %v24 = vld [vmem:[#allocation2 + $0x8] sm:$0xff]
    %vm25 = vcmask 130048
    %v26 = vsel %vm25, %v23, 0.0
    %27 = vadd.xlane.f32.xlu0 %v26
    %v28 = vpop.xlane.xlu0 %27
    %v29 = vsel %vm25, %v24, 0.0
    %30 = vadd.xlane.f32.xlu0 %v29
    %v31 = vpop.xlane.xlu0 %30
    %v32 = vadd.f32 %v26, %v29
    %v33 = vrot.slane %v32, 4
    %v34 = vadd.f32 %v32, %v33
    %v35 = vrot.slane %v34, 2
    %v36 = vadd.f32 %v34, %v35
    %v37 = vrot.slane %v36, 1
    %v38 = vadd.f32 %v36, %v37
    %v39 = vlaneseq
    %v40 = vshrl.u32 %v39, 7
    %v41 = vadd.s32 %v40, 8
    %v42 = vcvt.s32.f32 %v40
    %v43 = vcvt.s32.f32 %v41
    %v44 = vlaneseq
    %v45 = vand.u32 %v44, 127
    %v46 = vcvt.s32.f32 %v45
    %vm47 = vcmask 7168
    %v48 = vsel %vm47, %v28, 0.0
    %v49 = vsel %vm47, %v31, 0.0
    %v50 = vadd.f32 %v48, %v49
    %51 = vadd.xlane.f32.xlu0 %v50
    %v52 = vpop.xlane.xlu0 %51
    %v53 = vrot.slane %v52, 4
    %v54 = vadd.f32 %v52, %v53
    %v55 = vrot.slane %v54, 2
    %v56 = vadd.f32 %v54, %v55
    %v57 = vrot.slane %v56, 1
    %v58 = vadd.f32 %v56, %v57
    %s59 = vtos %v58
    %v60 = vmul.f32 %v28, %v42
    %v61 = vmul.f32 %v31, %v43
    %v62 = vsel %vm47, %v60, 0.0
    %v63 = vsel %vm47, %v61, 0.0
    %v64 = vadd.f32 %v62, %v63
    %65 = vadd.xlane.f32.xlu0 %v64
    %v66 = vpop.xlane.xlu0 %65
    %v67 = vrot.slane %v66, 4
    %v68 = vadd.f32 %v66, %v67
    %v69 = vrot.slane %v68, 2
    %v70 = vadd.f32 %v68, %v69
    %v71 = vrot.slane %v70, 1
    %v72 = vadd.f32 %v70, %v71
    %s73 = vtos %v72
    %v74 = vmul.f32 %v38, %v46
    %vm75 = vcmask 122880
    %v76 = vsel %vm75, %v74, 0.0
    %77 = vadd.xlane.f32.xlu0 %v76
    %v78 = vpop.xlane.xlu0 %77
    %v79 = vrot.slane %v78, 4
    %v80 = vadd.f32 %v78, %v79
    %v81 = vrot.slane %v80, 2
    %v82 = vadd.f32 %v80, %v81
    %v83 = vrot.slane %v82, 1
    %v84 = vadd.f32 %v82, %v83
    %s85 = vtos %v84
    %v86 = vstv %s59
    %v87 = vrcp.pop %v86
    %s88 = vtos %v87
    %s89 = smul.f32 %s73, %s88
    %s90 = ssub.f32 %s89, 9.0
    %s91 = smul.f32 %s85, %s88
    %s92 = ssub.f32 %s91, 9.0
    %s93 = smul.f32 %s90, %s90
    %s94 = smul.f32 %s92, %s92
    %s95 = sadd.f32 %s93, %s94
    %s96 = smul.f32 %s95, 0.5
    %s97 = scalar_lea.smem [#allocation5], 0
    %98 = sst [smem:[%s97]] %s96
    // Predicated region
    $region10: #{tpu_custom_call.1} parent=1 // pred_check
      _
    $region11: #{tpu_custom_call.1} parent=1 // pred_check_branch
      %100 = sbr.rel (0) target = $region13
    $region12: #{tpu_custom_call.1} parent=1 // pred_region
      %s102 = ssub.s32 16, 16
      %103 = vsyncadd [#allocation4], %s102
      %106 = dma.smem_to_hbm [#allocation5], 16, %s1, [#allocation4]
    $region13: #{tpu_custom_call.1} parent=1 // pred_fallthru
      _
    // Predicated region
    $region14: #{tpu_custom_call.1} parent=1 // pred_check
      _
    $region15: #{tpu_custom_call.1} parent=1 // pred_check_branch
      %108 = sbr.rel (0) target = $region17
    $region16: #{tpu_custom_call.1} parent=1 // pred_region
      %109 = dma.done [#allocation4], 16
    $region17: #{tpu_custom_call.1} parent=1 // pred_fallthru
      _
    %110 = sfence
    %111 = vsyncpa [#allocation3], 1
    %112 = vsyncpa [#allocation4], 1

</llo_original>
